<compile_context>
chip_gen: v7x
topology: tpu7x:2x2x1
jax: 0.10.0
libtpu: 0.0.40
codegen_flags: <defaults>
</compile_context>

<pallas_src>
import jax
import jax.numpy as jnp
from jax.experimental import pallas as pl
from jax.experimental.pallas import tpu as pltpu

IN_FEATURES = 67
OUT_FEATURES = 43

DEFAULT_TM = 8192        # rows per grid step for large M
TARGET_GRID_STEPS = 8    # keep >= ~4 steps per TensorCore on v7x (2 TCs)
MIN_PALLAS_ROWS = 4096   # below this, XLA's fused GEMV beats kernel overhead


def _round_up(a, b):
    return ((a + b - 1) // b) * b


def _sublane_multiple(dtype):
    # f32 -> 8, bf16 -> 16, int8/fp8 -> 32 (packing along sublanes)
    return max(8, 32 // jnp.dtype(dtype).itemsize)


def _linear_kernel(x_ref, w_ref, b_ref, o_ref):
    # x_ref: (TM, K)   w_ref: (K, N)   b_ref: (1, N)   o_ref: (TM, N)
    acc = jnp.dot(x_ref[...], w_ref[...], preferred_element_type=jnp.float32)
    o_ref[...] = (acc + b_ref[...]).astype(o_ref.dtype)


def linear_pallas(x, weight, bias, *, tm=DEFAULT_TM, min_pallas_rows=MIN_PALLAS_ROWS):
    """y = x @ weight.T + bias, matching torch.nn.Linear semantics.

    x: (..., in_features)  weight: (out_features, in_features)  bias: (out_features,)
    """
    orig_shape = x.shape
    K = orig_shape[-1]
    N = weight.shape[0]

    x2d = x.reshape(-1, K)
    M = x2d.shape[0]

    # One-time, tiny (67x43) wrapper-side transpose: kernel sees MXU-native (K, N).
    w_t = weight.T
    b2d = bias.reshape(1, N)

    if M < min_pallas_rows:
        # Small-M fast path: pallas_call fixed overhead dominates at these sizes.
        out = x2d @ w_t + b2d
        return out.reshape(*orig_shape[:-1], N)

    sub = _sublane_multiple(x2d.dtype)
    # Large tiles to amortize per-step overhead, but keep >= TARGET_GRID_STEPS
    # grid steps so v7x's two TensorCores both get work.
    tile_m = max(sub, min(tm, _round_up(pl.cdiv(M, TARGET_GRID_STEPS), sub)))
    grid = (pl.cdiv(M, tile_m),)   # ragged last block handled by Pallas masking

    out = pl.pallas_call(
        _linear_kernel,
        out_shape=jax.ShapeDtypeStruct((M, N), x.dtype),
        grid=grid,
        in_specs=[
            pl.BlockSpec((tile_m, K), lambda i: (i, 0)),  # x: tiled over M (pipelined)
            pl.BlockSpec((K, N), lambda i: (0, 0)),       # weight: resident in VMEM
            pl.BlockSpec((1, N), lambda i: (0, 0)),       # bias: resident in VMEM
        ],
        out_specs=pl.BlockSpec((tile_m, N), lambda i: (i, 0)),
        compiler_params=pltpu.CompilerParams(
            dimension_semantics=("parallel",),
        ),
    )(x2d, w_t, b2d)

    return out.reshape(*orig_shape[:-1], N)


def init_linear_params(key, in_features, out_features, dtype=jnp.float32):
    # Deterministic init mirroring torch.nn.Linear default (uniform in +/- 1/sqrt(fan_in)).
    kw, kb = jax.random.split(key)
    bound = 1.0 / (in_features ** 0.5)
    weight = jax.random.uniform(kw, (out_features, in_features), dtype, -bound, bound)
    bias = jax.random.uniform(kb, (out_features,), dtype, -bound, bound)
    return weight, bias


if __name__ == "__main__":
    key = jax.random.PRNGKey(0)
    k_x, k_p, k_big = jax.random.split(key, 3)

    weight, bias = init_linear_params(k_p, IN_FEATURES, OUT_FEATURES)

    # 1) Module-consistent small shape (batch=2, seq=8, in_features=67).
    #    Force the Pallas path (min_pallas_rows=0) so the kernel itself runs.
    x = jax.random.normal(k_x, (2, 8, IN_FEATURES), dtype=jnp.float32)
    y = linear_pallas(x, weight, bias, min_pallas_rows=0)
    jax.block_until_ready(y)
    y_ref = x @ weight.T + bias
    assert y.shape == (2, 8, OUT_FEATURES), y.shape
    assert jnp.allclose(y, y_ref, atol=1e-5, rtol=1e-5), "small-shape mismatch vs reference"

    # 2) Larger, misaligned M to exercise multi-step pipelining + ragged last block.
    xb = jax.random.normal(k_big, (8, 550, IN_FEATURES), dtype=jnp.float32)  # M = 4400
    yb = linear_pallas(xb, weight, bias)
    jax.block_until_ready(yb)
    yb_ref = xb @ weight.T + bias
    assert yb.shape == (8, 550, OUT_FEATURES), yb.shape
    assert jnp.allclose(yb, yb_ref, atol=1e-4, rtol=1e-5), "large-shape mismatch vs reference"

    print("KERNEL_OK")
</pallas_src>

<mosaic_0001>
module attributes {stable_mosaic.version = 11 : i64} {
  func.func @_linear_kernel(%arg0: i32, %arg1: memref<8x67xf32, #tpu.memory_space<vmem>>, %arg2: memref<67x43xf32, #tpu.memory_space<vmem>>, %arg3: memref<1x43xf32, #tpu.memory_space<vmem>>, %arg4: memref<8x43xf32, #tpu.memory_space<vmem>>) attributes {dimension_semantics = [#tpu.dimension_semantics<parallel>], iteration_bounds = array<i64: 2>, scalar_prefetch = 0 : i64, scratch_operands = 0 : i64, tpu.core_type = #tpu.core_type<tc>, window_params = [{transform_indices = @transform_0, window_bounds = array<i64: 8, 67>}, {pipeline_mode = #tpu.pipeline_mode<synchronous>, transform_indices = @transform_1, window_bounds = array<i64: 67, 43>}, {pipeline_mode = #tpu.pipeline_mode<synchronous>, transform_indices = @transform_2, window_bounds = array<i64: 1, 43>}, {transform_indices = @transform_3, window_bounds = array<i64: 8, 43>}]} {
    %c0 = arith.constant 0 : index
    %c0_0 = arith.constant 0 : index
    %0 = vector.load %arg1[%c0, %c0_0] : memref<8x67xf32, #tpu.memory_space<vmem>>, vector<8x67xf32>
    %c0_1 = arith.constant 0 : index
    %c0_2 = arith.constant 0 : index
    %1 = vector.load %arg2[%c0_1, %c0_2] : memref<67x43xf32, #tpu.memory_space<vmem>>, vector<67x43xf32>
    %cst = arith.constant dense<0.000000e+00> : vector<8x43xf32>
    %2 = tpu.matmul %0, %1, %cst {dimension_numbers = #tpu.dot_dimension_numbers<[1], [0], [0], [1], [0, 0, 1, 1], [], []>} : vector<8x67xf32>, vector<67x43xf32>, vector<8x43xf32> -> vector<8x43xf32>
    %c0_3 = arith.constant 0 : index
    %c0_4 = arith.constant 0 : index
    %3 = vector.load %arg3[%c0_3, %c0_4] : memref<1x43xf32, #tpu.memory_space<vmem>>, vector<1x43xf32>
    %4 = vector.broadcast %3 : vector<1x43xf32> to vector<8x43xf32>
    %5 = arith.addf %2, %4 : vector<8x43xf32>
    %c0_5 = arith.constant 0 : index
    %c0_6 = arith.constant 0 : index
    %6 = vector.load %arg4[%c0_5, %c0_6] : memref<8x43xf32, #tpu.memory_space<vmem>>, vector<8x43xf32>
    tpu.vector_store %arg4[%c0_5, %c0_6], %5 {strides = array<i32>} : memref<8x43xf32, #tpu.memory_space<vmem>>, vector<8x43xf32>,
    return
  }
  func.func @transform_0(%arg0: i32) -> (i32, i32) {
    %c0_i32 = arith.constant 0 : i32
    %c0_i32_0 = arith.constant 0 : i32
    return %arg0, %c0_i32 : i32, i32
  }
  func.func @transform_1(%arg0: i32) -> (i32, i32) {
    %c0_i32 = arith.constant 0 : i32
    %c0_i32_0 = arith.constant 0 : i32
    %c0_i32_1 = arith.constant 0 : i32
    return %c0_i32, %c0_i32_0 : i32, i32
  }
  func.func @transform_2(%arg0: i32) -> (i32, i32) {
    %c0_i32 = arith.constant 0 : i32
    %c0_i32_0 = arith.constant 0 : i32
    %c0_i32_1 = arith.constant 0 : i32
    return %c0_i32, %c0_i32_0 : i32, i32
  }
  func.func @transform_3(%arg0: i32) -> (i32, i32) {
    %c0_i32 = arith.constant 0 : i32
    %c0_i32_0 = arith.constant 0 : i32
    return %arg0, %c0_i32 : i32, i32
  }
}

</mosaic_0001>

<llo_original>
// kernel: tpu_custom_call.1
$region0: #{tpu_custom_call.1}
  #allocation0 [shape = 'u32[]', space=smem, size = 0x4, offset = 0x4, fixed_abs, tag = 'smem constant byte address 0x4 - core index']
  #allocation1 [shape = 'u32[144,128]{1,0:T(1,128)}', space=vmem, size = 0x12000, scoped, tag = 'internal scratch']
  %s0 = inlined_call_operand.vmem [shape: f32[16,67], index: 0, kind: input, shape index: {}]
  %s1 = inlined_call_operand.vmem [shape: f32[67,43], index: 1, kind: input, shape index: {}]
  %s2 = inlined_call_operand.vmem [shape: f32[1,43], index: 2, kind: input, shape index: {}]
  %s3 = inlined_call_operand.hbm [shape: f32[16,43], index: 3, kind: output, shape index: {}]
  %s4 = sld [smem:[#allocation0]]
  $region45: #{tpu_custom_call.1} parent=0
    _
  %s6 = ssub.s32 1, %s4
  %s7 = scalar_select 0, %s6, %s4
  $region1: #{tpu_custom_call.1} parent=0
    #allocation2 [shape = 'u8[8192]{0}', space=vmem, size = 0x2000, scoped, tag = 'output window, operand 0']
    #allocation3 [shape = 's32[2]{0}', space=sflag, size = 0x8, scoped, tag = 'scoped memory for tpu_custom_call.1']
    %8 = vsyncpa [#allocation3], 0
    %s9 = scalar_lea.sflag [#allocation3], 1
    %10 = vsyncpa %s9, 0
    loop: start=0, step=1, limit=4
    $region2: #{tpu_custom_call.1} parent=1 // loop_pre_header
      _
    $region3: #{tpu_custom_call.1} parent=1 // loop_header
      %s12 = sphi 0, %s16
      %p13 = scmp.ge.s32.totalorder %s12, 4
      %s22 = sphi 0, %s24
      %s25 = sphi 0, %s22
      %s26 = sphi 0, %s25
      %s42 = sphi 0, %s26
      %s46 = sphi 0, %s46
      %s48 = sphi 0, %s46
      %s49 = sphi 0, %s48
      %s63 = sphi 0, %s49
      %s67 = sphi 0, %s67
      %s69 = sphi 0, %s67
      %s70 = sphi 0, %s69
      %s84 = sphi 0, %s70
      %s90 = sphi 0, %s92
      %s93 = sphi 0, %s90
      %s94 = sphi 0, %s93
      %s110 = sphi 0, %s94
    $region4: #{tpu_custom_call.1} parent=1 // loop_header_branch
      %15 = sbr.rel (%p13) target = $region8
    $region5: #{tpu_custom_call.1} parent=1 // loop_body
      %s17 = ssub.s32 %s12, 1
      %s18 = ssub.s32 %s12, 2
      %s19 = sadd.s32 %s12, 1
      %s20 = ssub.s32 %s12, %s19
      %p21 = scmp.eq.s32.totalorder %s20, 0
      %s23 = sadd.s32 %s22, 1
      %s24 = scalar_select %p21, %s22, %s23
      %p27 = pneg %p21
      %p28 = scmp.eq.s32.totalorder %s12, 1
      %p29 = por %p27, %p28
      %p30 = scmp.ne.s32.totalorder %s22, %s25
      %p31 = scmp.eq.s32.totalorder %s12, 0
      %p32 = por %p30, %p31
      %p33 = scmp.ne.s32.totalorder %s22, %s25
      %p34 = scmp.eq.s32.totalorder %s17, 1
      %p35 = por %p33, %p34
      %p36 = scmp.ne.s32.totalorder %s25, %s26
      %p37 = scmp.eq.s32.totalorder %s17, 0
      %p38 = por %p36, %p37
      %p39 = scmp.ne.s32.totalorder %s25, %s26
      %p40 = scmp.eq.s32.totalorder %s18, 1
      %p41 = por %p39, %p40
      %p43 = scmp.ne.s32.totalorder %s26, %s42
      %p44 = scmp.eq.s32.totalorder %s18, 0
      %p45 = por %p43, %p44
      %s47 = sadd.s32 %s46, 1
      %p50 = scmp.eq.s32.totalorder %s12, 1
      %p51 = scmp.ne.s32.totalorder %s46, %s48
      %p52 = scmp.eq.s32.totalorder %s12, 0
      %p53 = por %p51, %p52
      %p54 = scmp.ne.s32.totalorder %s46, %s48
      %p55 = scmp.eq.s32.totalorder %s17, 1
      %p56 = por %p54, %p55
      %p57 = scmp.ne.s32.totalorder %s48, %s49
      %p58 = scmp.eq.s32.totalorder %s17, 0
      %p59 = por %p57, %p58
      %p60 = scmp.ne.s32.totalorder %s48, %s49
      %p61 = scmp.eq.s32.totalorder %s18, 1
      %p62 = por %p60, %p61
      %p64 = scmp.ne.s32.totalorder %s49, %s63
      %p65 = scmp.eq.s32.totalorder %s18, 0
      %p66 = por %p64, %p65
      %s68 = sadd.s32 %s67, 1
      %p71 = scmp.eq.s32.totalorder %s12, 1
      %p72 = scmp.ne.s32.totalorder %s67, %s69
      %p73 = scmp.eq.s32.totalorder %s12, 0
      %p74 = por %p72, %p73
      %p75 = scmp.ne.s32.totalorder %s67, %s69
      %p76 = scmp.eq.s32.totalorder %s17, 1
      %p77 = por %p75, %p76
      %p78 = scmp.ne.s32.totalorder %s69, %s70
      %p79 = scmp.eq.s32.totalorder %s17, 0
      %p80 = por %p78, %p79
      %p81 = scmp.ne.s32.totalorder %s69, %s70
      %p82 = scmp.eq.s32.totalorder %s18, 1
      %p83 = por %p81, %p82
      %p85 = scmp.ne.s32.totalorder %s70, %s84
      %p86 = scmp.eq.s32.totalorder %s18, 0
      %p87 = por %p85, %p86
      %s88 = ssub.s32 %s12, %s19
      %p89 = scmp.eq.s32.totalorder %s88, 0
      %s91 = sadd.s32 %s90, 1
      %s92 = scalar_select %p89, %s90, %s91
      %p95 = pneg %p89
      %p96 = scmp.eq.s32.totalorder %s12, 1
      %p97 = por %p95, %p96
      %p98 = scmp.ne.s32.totalorder %s90, %s93
      %p99 = scmp.eq.s32.totalorder %s12, 0
      %p100 = por %p98, %p99
      %p101 = scmp.ne.s32.totalorder %s90, %s93
      %p102 = scmp.eq.s32.totalorder %s17, 1
      %p103 = por %p101, %p102
      %p104 = scmp.ne.s32.totalorder %s93, %s94
      %p105 = scmp.eq.s32.totalorder %s17, 0
      %p106 = por %p104, %p105
      %p107 = scmp.ne.s32.totalorder %s93, %s94
      %p108 = scmp.eq.s32.totalorder %s18, 1
      %p109 = por %p107, %p108
      %p111 = scmp.ne.s32.totalorder %s94, %s110
      %p112 = scmp.eq.s32.totalorder %s18, 0
      %p113 = por %p111, %p112
      %p114 = scmp.le.s32.totalorder 1, %s12
      %p115 = scmp.lt.s32.totalorder %s12, 3
      %p116 = pnand %p114, %p115
      %p117 = pneg %p116
      // Predicated region
      $region9: #{tpu_custom_call.1} parent=5 // pred_check
        _
      $region10: #{tpu_custom_call.1} parent=5 // pred_check_branch
        %119 = sbr.rel (%p116) target = $region12
      $region11: #{tpu_custom_call.1} parent=5 // pred_region
        %s120 = ssub.s32 %s12, 1
        // Predicated region
        $region13: #{tpu_custom_call.1} parent=11 // pred_check
          %p121 = pneg %p59
        $region14: #{tpu_custom_call.1} parent=11 // pred_check_branch
          %123 = sbr.rel (%p121) target = $region16
        $region15: #{tpu_custom_call.1} parent=11 // pred_region
          _
        $region16: #{tpu_custom_call.1} parent=11 // pred_fallthru
          _
        // Predicated region
        $region17: #{tpu_custom_call.1} parent=11 // pred_check
          %p124 = pneg %p80
        $region18: #{tpu_custom_call.1} parent=11 // pred_check_branch
          %126 = sbr.rel (%p124) target = $region20
        $region19: #{tpu_custom_call.1} parent=11 // pred_region
          _
        $region20: #{tpu_custom_call.1} parent=11 // pred_fallthru
          _
      $region12: #{tpu_custom_call.1} parent=5 // pred_fallthru
        _
      %p127 = scmp.lt.s32.totalorder %s12, 2
      // Predicated region
      $region21: #{tpu_custom_call.1} parent=5 // pred_check
        %p128 = pneg %p127
      $region22: #{tpu_custom_call.1} parent=5 // pred_check_branch
        %130 = sbr.rel (%p128) target = $region24
      $region23: #{tpu_custom_call.1} parent=5 // pred_region
        // Predicated region
        $region25: #{tpu_custom_call.1} parent=23 // pred_check
          %p131 = pneg %p32
        $region26: #{tpu_custom_call.1} parent=23 // pred_check_branch
          %133 = sbr.rel (%p131) target = $region28
        $region27: #{tpu_custom_call.1} parent=23 // pred_region
          %p134 = scmp.lt.s32.totalorder %s12, 1
          %s135 = scalar_select %p134, %s12, 1
          %s136 = smul.addr %s135, 8
          %s137 = scalar_lea.vmem %s0, %s136
        $region28: #{tpu_custom_call.1} parent=23 // pred_fallthru
          _
      $region24: #{tpu_custom_call.1} parent=5 // pred_fallthru
        _
      %p138 = scmp.le.s32.totalorder 1, %s12
      %p139 = scmp.lt.s32.totalorder %s12, 3
      %p140 = pnand %p138, %p139
      %p141 = pneg %p140
      // Predicated region
      $region29: #{tpu_custom_call.1} parent=5 // pred_check
        _
      $region30: #{tpu_custom_call.1} parent=5 // pred_check_branch
        %143 = sbr.rel (%p140) target = $region32
      $region31: #{tpu_custom_call.1} parent=5 // pred_region
        %s144 = ssub.s32 %s12, 1
        %p145 = scmp.lt.s32.totalorder %s17, 1
        %s146 = scalar_select %p145, %s17, 1
        %s147 = smul.addr %s146, 8
        %s148 = scalar_lea.vmem %s0, %s147
        %p149 = pneg %p38
        %p150 = pneg %p35
        %p151 = pneg %p59
        %p152 = pneg %p56
        %p153 = pneg %p80
        %p154 = pneg %p77
        %p155 = pneg %p106
        %p156 = pneg %p103
        %s157 = sand.u32 %s93, 1
        %s158 = scalar_lea.sflag [#allocation3], %s157
        %s159 = sand.u32 %s93, 1
        %s160 = smul.addr %s159, 8
        %s161 = scalar_lea.vmem [#allocation2], %s160
        %p162 = scmp.lt.s32.totalorder %s17, 1
        %s163 = scalar_select %p162, %s17, 1
        %s164 = smul.addr %s163, 8
        %s165 = scalar_lea.vmem %s0, %s164
        %v166 = vld [vmem:[%s165] sm:$0xff]
        %v167 = vld [vmem:[%s1] sm:$0xff]
        %v168 = vld [vmem:[%s1 + $0x8] sm:$0xff]
        %v169 = vld [vmem:[%s1 + $0x10] sm:$0xff]
        %v170 = vld [vmem:[%s1 + $0x18] sm:$0xff]
        %v171 = vld [vmem:[%s1 + $0x20] sm:$0xff]
        %v172 = vld [vmem:[%s1 + $0x28] sm:$0xff]
        %v173 = vld [vmem:[%s1 + $0x30] sm:$0xff]
        %v174 = vld [vmem:[%s1 + $0x38] sm:$0xff]
        %v175 = vld [vmem:[%s1 + $0x40] sm:$0x7]
        %v176 = vld [vmem:[%s2] sm:$0x1]
        %v178 = vlaneseq
        %v179 = vshrl.u32 %v178, 7
        %v180 = vsub.s32 0, %v179
        %v181 = vrot.slane %v176, %v180
        %vm183 = vcmask 547840
        %v185 = vsel %vm183, %v166, 0
        %vm187 = vcmask 1042432
        %v189 = vsel %vm187, %v175, 0
        %191 = vmatprep.subr.mxu0 0.0
        %192 = vmatpush1.msra.mxu0 %v167
        %193 = vmatprep.subr.mxu0 0.0
        %194 = vmatpush1.msra.mxu0 %v168
        %195 = vmatprep.subr.mxu0 0.0
        %196 = vmatpush1.msra.mxu0 %v169
        %197 = vmatprep.subr.mxu0 0.0
        %198 = vmatpush1.msra.mxu0 %v170
        %199 = vmatprep.subr.mxu0 0.0
        %200 = vmatpush1.msra.mxu0 %v171
        %201 = vmatprep.subr.mxu0 0.0
        %202 = vmatpush1.msra.mxu0 %v172
        %203 = vmatprep.subr.mxu0 0.0
        %204 = vmatpush1.msra.mxu0 %v173
        %205 = vmatprep.subr.mxu0 0.0
        %206 = vmatpush1.msra.mxu0 %v174
        %207 = vmatprep.subr.mxu0 0.0
        %208 = vmatpush1.msra.mxu0 %v189
        %209 = vmatprep.subr.mxu0 0.0
        %210 = vmatpush1.msra.mxu0 0.0
        %211 = vmatprep.subr.mxu0 0.0
        %212 = vmatpush1.msra.mxu0 0.0
        %213 = vmatprep.subr.mxu0 0.0
        %214 = vmatpush1.msra.mxu0 0.0
        %215 = vmatprep.subr.mxu0 0.0
        %216 = vmatpush1.msra.mxu0 0.0
        %217 = vmatprep.subr.mxu0 0.0
        %218 = vmatpush1.msra.mxu0 0.0
        %219 = vmatprep.subr.mxu0 0.0
        %220 = vmatpush1.msra.mxu0 0.0
        %221 = vmatprep.subr.mxu0 0.0
        %222 = vmatpush1.msra.mxu0 0.0
        %223 = vmatprep.subr.mxu0 0.0
        %224 = vmatpush1.msra.mxu0 0.0
        %225 = vmatprep.subr.mxu0 0.0
        %226 = vmatpush1.msra.mxu0 0.0
        %227 = vmatprep.subr.mxu0 0.0
        %228 = vmatpush1.msra.mxu0 0.0
        %229 = vmatprep.subr.mxu0 0.0
        %230 = vmatpush1.msra.mxu0 0.0
        %231 = vmatprep.subr.mxu0 0.0
        %232 = vmatpush1.msra.mxu0 0.0
        %233 = vmatprep.subr.mxu0 0.0
        %234 = vmatpush1.msra.mxu0 0.0
        %235 = vmatprep.subr.mxu0 0.0
        %236 = vmatpush1.msra.mxu0 0.0
        %237 = vmatprep.subr.mxu0 0.0
        %238 = vmatpush1.msra.mxu0 0.0
        %239 = vmatprep.subr.mxu0 0.0
        %240 = vmatpush1.msra.mxu0 0.0
        %241 = vmatprep.subr.mxu0 0.0
        %242 = vmatpush1.msra.mxu0 0.0
        %243 = vmatprep.subr.mxu0 0.0
        %244 = vmatpush1.msra.mxu0 0.0
        %245 = vmatprep.subr.mxu0 0.0
        %246 = vmatpush1.msra.mxu0 0.0
        %247 = vmatprep.subr.mxu0 0.0
        %248 = vmatpush1.msra.mxu0 0.0
        %249 = vmatprep.subr.mxu0 0.0
        %250 = vmatpush1.msra.mxu0 0.0
        %251 = vmatprep.subr.mxu0 0.0
        %252 = vmatpush1.msra.mxu0 0.0
        %253 = vmatprep.subr.mxu0 0.0
        %254 = vmatpush1.msra.mxu0 0.0
        %255 = vmatprep.mubr.f32.mxu0 0.0
        %256 = vmatmul.mubr.f32.gmra.mrb[0].mxu0 %v185
        %v257 = vpop.f32.mrb[0].mxu0
        %v258 = vadd.f32 %v181, %v257
        %v259 = vpop.f32.mrb[0].mxu0
        %260 = vdwg.mxu0
        %vm261 = vcmask 351232
        %262 = vst.msk [vmem:[%s161] sm:$0xff] %vm261, %v258
        %s263 = sand.u32 %s93, 1
        %s264 = scalar_lea.sflag [#allocation3], %s263
        %s265 = sand.u32 %s93, 1
        %s266 = smul.addr %s265, 8
        %s267 = scalar_lea.vmem [#allocation2], %s266
        // Predicated region
        $region33: #{tpu_custom_call.1} parent=31 // pred_check
          %p268 = pneg %p103
        $region34: #{tpu_custom_call.1} parent=31 // pred_check_branch
          %270 = sbr.rel (%p268) target = $region36
        $region35: #{tpu_custom_call.1} parent=31 // pred_region
          %s272 = ssub.s32 128, 128
          %273 = vsyncadd %s264, %s272
          %s274 = smul.addr %s17, 128
          %s275 = scalar_lea.hbm %s3, %s274
          %s277 = sshll.u32 %s267, 4
          %s278 = int_to_ptr.vmem [resolvable:$true] %s277
          %280 = dma.vmem_to_hbm [thread:$0]  %s278, 128, %s275, %s264
        $region36: #{tpu_custom_call.1} parent=31 // pred_fallthru
          _
      $region32: #{tpu_custom_call.1} parent=5 // pred_fallthru
        _
      %p281 = scmp.le.s32.totalorder 2, %s12
      // Predicated region
      $region37: #{tpu_custom_call.1} parent=5 // pred_check
        %p282 = pneg %p281
      $region38: #{tpu_custom_call.1} parent=5 // pred_check_branch
        %284 = sbr.rel (%p282) target = $region40
      $region39: #{tpu_custom_call.1} parent=5 // pred_region
        %s285 = ssub.s32 %s12, 2
        // Predicated region
        $region41: #{tpu_custom_call.1} parent=39 // pred_check
          %p286 = pneg %p109
        $region42: #{tpu_custom_call.1} parent=39 // pred_check_branch
          %288 = sbr.rel (%p286) target = $region44
        $region43: #{tpu_custom_call.1} parent=39 // pred_region
          %s289 = sand.u32 %s94, 1
          %s290 = scalar_lea.sflag [#allocation3], %s289
          %s291 = sand.u32 %s94, 1
          %s292 = smul.addr %s291, 8
          %s293 = scalar_lea.vmem [#allocation2], %s292
          %294 = dma.done %s290, 128
        $region44: #{tpu_custom_call.1} parent=39 // pred_fallthru
          _
      $region40: #{tpu_custom_call.1} parent=5 // pred_fallthru
        _
    $region6: #{tpu_custom_call.1} parent=1 // loop_footer
      %s16 = sadd.s32 1, %s12
    $region7: #{tpu_custom_call.1} parent=1 // loop_footer_branch
      %11 = sbr.rel target = $region3
    $region8: #{tpu_custom_call.1} parent=1 // loop_exit
      _
    %295 = vsyncpa [#allocation3], 1
    %s296 = scalar_lea.sflag [#allocation3], 1
    %297 = vsyncpa %s296, 1

</llo_original>
